<compile_context>
chip_gen: v6e
topology: v6e:2x2x1
jax: 0.10.0
libtpu: 0.0.40
codegen_flags: <defaults>
</compile_context>

<pallas_src>
import functools

import numpy as np
import jax
import jax.numpy as jnp
from jax import lax
from jax.experimental import pallas as pl
from jax.experimental.pallas import tpu as pltpu

EPS = 1e-6
_LANES = 128


def _vmem_limit_bytes():
    """Generation-aware scoped-VMEM limit (~3/4 of physical, capped at 96 MiB)."""
    try:
        cap = int(pltpu.get_tpu_info().vmem_capacity_bytes)
    except Exception:
        cap = 64 * 1024 * 1024  # v7x physical VMEM -> safe lower bound everywhere
    return int(min((cap * 3) // 4, 96 * 1024 * 1024))


def ce_loss_kernel(logits_ref, targets_ref, out_ref, *, n_total, blocks_per_split):
    # logits_ref:  (tile_n, C) f32/bf16 in VMEM
    # targets_ref: (tile_n, 1) int32 in VMEM
    # out_ref:     (1, 1, 128) f32 VMEM partial-sum accumulator, resident across
    #              the "arbitrary" block axis for a fixed split index.
    s = pl.program_id(0)  # "parallel" split axis (megacore on v7x)
    b = pl.program_id(1)  # "arbitrary" row-block axis (sequential reduction)

    @pl.when(b == 0)
    def _init():
        out_ref[...] = jnp.zeros_like(out_ref)

    x = logits_ref[...].astype(jnp.float32)               # (tile_n, C)
    tgt = targets_ref[...]                                 # (tile_n, 1) int32
    tn, c = x.shape

    # Numerically-stable softmax pieces (matches the PyTorch reference).
    m = jnp.max(x, axis=-1, keepdims=True)                 # (tile_n, 1)  XLU
    num = jnp.exp(x - m)                                    # (tile_n, C)  EUP
    denom = jnp.sum(num, axis=-1, keepdims=True)            # (tile_n, 1)  XLU

    # Select the target-class numerator with a VPU `where` (no f32 one-hot
    # materialization); divide and log run on (tile_n, 1) only.
    class_ids = lax.broadcasted_iota(jnp.int32, (tn, c), 1)
    num_t = jnp.sum(jnp.where(class_ids == tgt, num, 0.0),
                    axis=-1, keepdims=True)                 # (tile_n, 1)
    per_row = -jnp.log(num_t / (denom + EPS) + EPS)          # (tile_n, 1)

    # Mask rows past the logical end of the batch: covers the ragged last
    # block (no wrapper pad) and phantom blocks clamped in the index_map.
    # jnp.where selects 0.0 even if the stale rows produced NaN/Inf.
    row0 = (s * blocks_per_split + b) * tn
    row_ids = lax.broadcasted_iota(jnp.int32, (tn, 1), 0) + row0
    per_row = jnp.where(row_ids < n_total, per_row, 0.0)

    out_ref[...] += jnp.sum(per_row)


class CELossWithLogitsPallas:
    """Pallas port of the PyTorch CELossWithLogits forward pass."""

    _MAX_TILE_ROWS = 16384

    def __init__(self, class_counts):
        class_counts = np.asarray(class_counts, dtype=np.float32)
        # Like the PyTorch reference: class_counts only defines num_labels.
        self.num_labels = int(len(class_counts))
        self.eps = EPS
        self._vmem_limit = _vmem_limit_bytes()
        # One logits block + double-buffering + ~4 full-width f32 temporaries
        # (x, exp, iota/compare, select) must fit the scoped limit -> budget
        # ~1/8 of it per block (~12 MiB blocks on v5e/v6e, ~6 MiB on v7x).
        self._tile_bytes = max(512 * 1024, self._vmem_limit // 8)

    def _pick_tile_n(self, n, c, itemsize, mult):
        rows = self._tile_bytes // max(1, c * itemsize)
        rows = min(rows, self._MAX_TILE_ROWS)
        rows = max(mult, (rows // mult) * mult)
        if rows >= n:
            return n  # single block equal to the full array (always layout-legal)
        return rows

    def __call__(self, logits, targets, tile_n=None, num_splits=2):
        n, c = logits.shape
        assert c == self.num_labels
        itemsize = jnp.dtype(logits.dtype).itemsize
        mult = 16 if itemsize == 2 else 8  # sublane multiple (bf16 vs f32)

        if tile_n is None:
            tile_n = self._pick_tile_n(n, c, itemsize, mult)
        else:
            tile_n = min(int(tile_n), n)
            if tile_n < n:
                tile_n = max(mult, (tile_n // mult) * mult)

        nblk = pl.cdiv(n, tile_n)
        num_splits = max(1, min(int(num_splits), nblk))
        bps = pl.cdiv(nblk, num_splits)  # blocks per split

        targets2d = targets.astype(jnp.int32).reshape(n, 1)

        kernel = functools.partial(
            ce_loss_kernel, n_total=n, blocks_per_split=bps)

        def in_map(s, b):
            # num_splits * bps may exceed nblk by one phantom block; clamp it
            # onto the last real block (in-bounds DMA) -- its rows are masked
            # out in-kernel via the row_ids < n_total test.
            return (jnp.minimum(s * bps + b, nblk - 1), 0)

        cost = pl.CostEstimate(
            flops=5 * n * c,
            transcendentals=n * c + 2 * n,
            bytes_accessed=itemsize * n * c + 4 * n + 4 * num_splits * _LANES,
        )

        partials = pl.pallas_call(
            kernel,
            out_shape=jax.ShapeDtypeStruct((num_splits, 1, _LANES), jnp.float32),
            grid_spec=pltpu.PrefetchScalarGridSpec(
                num_scalar_prefetch=0,
                grid=(num_splits, bps),
                in_specs=[
                    pl.BlockSpec((tile_n, c), in_map),
                    pl.BlockSpec((tile_n, 1), in_map),
                ],
                # Lane-dense per-split partial sum, resident across the
                # "arbitrary" block axis (accumulator pattern).
                out_specs=pl.BlockSpec((1, 1, _LANES), lambda s, b: (s, 0, 0)),
            ),
            compiler_params=pltpu.CompilerParams(
                # Split axis is independent (megacore-shardable on v7x); the
                # row-block axis is a sequential reduction into the same block.
                dimension_semantics=("parallel", "arbitrary"),
                vmem_limit_bytes=self._vmem_limit,
            ),
            cost_estimate=cost,
        )(logits, targets2d)

        # Final cross-split reduction + mean in the wrapper (tiny).
        return jnp.sum(partials[:, 0, 0]) / jnp.float32(n)


def ce_loss_ref(logits, targets, num_labels):
    """Pure-JAX reference matching the PyTorch forward exactly."""
    onehot = jax.nn.one_hot(targets, num_labels, dtype=jnp.float32)
    m = jnp.max(logits, axis=-1, keepdims=True)
    z = logits - m
    num = jnp.exp(z)
    denom = jnp.sum(num, axis=-1, keepdims=True)
    sigma = num / (denom + EPS)
    loss = jnp.sum(-onehot * jnp.log(sigma + EPS), axis=-1)
    return jnp.mean(loss)


if __name__ == "__main__":
    num_labels = 32
    class_counts = np.arange(1, num_labels + 1, dtype=np.float32)  # only len() matters
    loss_fn = CELossWithLogitsPallas(class_counts)

    key = jax.random.PRNGKey(0)
    keys = jax.random.split(key, 8)

    # Case 1: tiny batch, single full-array block (num_splits clamps to 1).
    logits_a = jax.random.normal(keys[0], (8, num_labels), dtype=jnp.float32)
    targets_a = jax.random.randint(keys[1], (8,), 0, num_labels, dtype=jnp.int32)
    loss_a = jax.block_until_ready(loss_fn(logits_a, targets_a))
    ref_a = jax.block_until_ready(ce_loss_ref(logits_a, targets_a, num_labels))
    np.testing.assert_allclose(np.asarray(loss_a), np.asarray(ref_a),
                               rtol=1e-5, atol=1e-5)

    # Case 2: ragged N, odd block count across the 2-way parallel split
    # (n=40, tile=16 -> 3 blocks, 2 splits of 2 -> exercises the ragged last
    # block, the phantom-block clamp, and the row mask -- no wrapper pad).
    logits_b = jax.random.normal(keys[2], (40, num_labels), dtype=jnp.float32)
    targets_b = jax.random.randint(keys[3], (40,), 0, num_labels, dtype=jnp.int32)
    loss_b = jax.block_until_ready(
        loss_fn(logits_b, targets_b, tile_n=16, num_splits=2))
    ref_b = jax.block_until_ready(ce_loss_ref(logits_b, targets_b, num_labels))
    np.testing.assert_allclose(np.asarray(loss_b), np.asarray(ref_b),
                               rtol=1e-5, atol=1e-5)

    # Case 3: bf16 logits (halved HBM traffic; kernel upcasts in VMEM),
    # 16-row sublane multiple, ragged last block.
    logits_c = jax.random.normal(keys[4], (48, num_labels),
                                 dtype=jnp.float32).astype(jnp.bfloat16)
    targets_c = jax.random.randint(keys[5], (48,), 0, num_labels, dtype=jnp.int32)
    loss_c = jax.block_until_ready(
        loss_fn(logits_c, targets_c, tile_n=32, num_splits=2))
    ref_c = jax.block_until_ready(
        ce_loss_ref(logits_c.astype(jnp.float32), targets_c, num_labels))
    np.testing.assert_allclose(np.asarray(loss_c), np.asarray(ref_c),
                               rtol=1e-5, atol=1e-5)

    # Case 4: multi-block sweep per split (grid (2, 4)), wider class dim.
    num_labels_d = 128
    loss_fn_d = CELossWithLogitsPallas(np.ones(num_labels_d, dtype=np.float32))
    logits_d = jax.random.normal(keys[6], (2048, num_labels_d), dtype=jnp.float32)
    targets_d = jax.random.randint(keys[7], (2048,), 0, num_labels_d,
                                   dtype=jnp.int32)
    loss_d = jax.block_until_ready(
        loss_fn_d(logits_d, targets_d, tile_n=256, num_splits=2))
    ref_d = jax.block_until_ready(ce_loss_ref(logits_d, targets_d, num_labels_d))
    np.testing.assert_allclose(np.asarray(loss_d), np.asarray(ref_d),
                               rtol=1e-5, atol=1e-5)

    print("KERNEL_OK")
</pallas_src>

<mosaic_0001>
module attributes {stable_mosaic.version = 11 : i64} {
  func.func @ce_loss_kernel(%arg0: i32, %arg1: i32, %arg2: memref<8x32xf32, #tpu.memory_space<vmem>>, %arg3: memref<8x1xi32, #tpu.memory_space<vmem>>, %arg4: memref<1x1x128xf32, #tpu.memory_space<vmem>>) attributes {dimension_semantics = [#tpu.dimension_semantics<parallel>, #tpu.dimension_semantics<arbitrary>], iteration_bounds = array<i64: 1, 1>, scalar_prefetch = 0 : i64, scratch_operands = 0 : i64, tpu.core_type = #tpu.core_type<tc>, window_params = [{transform_indices = @transform_0, window_bounds = array<i64: 8, 32>}, {transform_indices = @transform_1, window_bounds = array<i64: 8, 1>}, {transform_indices = @transform_2, window_bounds = array<i64: 1, 1, 128>}]} {
    %c0_i32 = arith.constant 0 : i32
    %0 = arith.cmpi eq, %arg1, %c0_i32 : i32
    %1 = arith.extui %0 : i1 to i32
    %c0_i32_0 = arith.constant 0 : i32
    %2 = arith.cmpi ne, %1, %c0_i32_0 : i32
    scf.if %2 {
      %cst_19 = arith.constant 0.000000e+00 : f32
      %45 = vector.broadcast %cst_19 : f32 to vector<1x1x128xf32>
      %c0_20 = arith.constant 0 : index
      %c0_21 = arith.constant 0 : index
      %c0_22 = arith.constant 0 : index
      %46 = vector.load %arg4[%c0_20, %c0_21, %c0_22] : memref<1x1x128xf32, #tpu.memory_space<vmem>>, vector<1x1x128xf32>
      tpu.vector_store %arg4[%c0_20, %c0_21, %c0_22], %45 {strides = array<i32>} : memref<1x1x128xf32, #tpu.memory_space<vmem>>, vector<1x1x128xf32>,
    } else {
    }
    %c0 = arith.constant 0 : index
    %c0_1 = arith.constant 0 : index
    %3 = vector.load %arg2[%c0, %c0_1] : memref<8x32xf32, #tpu.memory_space<vmem>>, vector<8x32xf32>
    %c0_2 = arith.constant 0 : index
    %c0_3 = arith.constant 0 : index
    %4 = vector.load %arg3[%c0_2, %c0_3] : memref<8x1xi32, #tpu.memory_space<vmem>>, vector<8x1xi32>
    %cst = arith.constant dense<0xFF800000> : vector<8xf32>
    %5 = vector.multi_reduction <maximumf>, %3, %cst [1] : vector<8x32xf32> to vector<8xf32>
    %6 = vector.shape_cast %5 : vector<8xf32> to vector<8x1xf32>
    %7 = vector.broadcast %6 : vector<8x1xf32> to vector<8x32xf32>
    %8 = arith.subf %3, %7 : vector<8x32xf32>
    %9 = math.exp %8 : vector<8x32xf32>
    %cst_4 = arith.constant dense<0.000000e+00> : vector<8xf32>
    %10 = vector.multi_reduction <add>, %9, %cst_4 [1] : vector<8x32xf32> to vector<8xf32>
    %11 = vector.shape_cast %10 : vector<8xf32> to vector<8x1xf32>
    %12 = tpu.iota {dimensions = array<i32: 1>} : vector<8x32xi32>
    %13 = vector.broadcast %4 : vector<8x1xi32> to vector<8x32xi32>
    %14 = arith.cmpi eq, %12, %13 : vector<8x32xi32>
    %cst_5 = arith.constant 0.000000e+00 : f32
    %15 = vector.broadcast %cst_5 : f32 to vector<8x32xf32>
    %16 = arith.select %14, %9, %15 : vector<8x32xi1>, vector<8x32xf32>
    %cst_6 = arith.constant dense<0.000000e+00> : vector<8xf32>
    %17 = vector.multi_reduction <add>, %16, %cst_6 [1] : vector<8x32xf32> to vector<8xf32>
    %18 = vector.shape_cast %17 : vector<8xf32> to vector<8x1xf32>
    %cst_7 = arith.constant 9.99999997E-7 : f32
    %19 = vector.broadcast %cst_7 : f32 to vector<8x1xf32>
    %20 = arith.addf %11, %19 : vector<8x1xf32>
    %21 = arith.divf %18, %20 : vector<8x1xf32>
    %cst_8 = arith.constant 9.99999997E-7 : f32
    %22 = vector.broadcast %cst_8 : f32 to vector<8x1xf32>
    %23 = arith.addf %21, %22 : vector<8x1xf32>
    %24 = math.log %23 : vector<8x1xf32>
    %cst_9 = arith.constant 0.000000e+00 : f32
    %25 = vector.broadcast %cst_9 : f32 to vector<8x1xf32>
    %26 = arith.subf %25, %24 : vector<8x1xf32>
    %c1_i32 = arith.constant 1 : i32
    %27 = arith.muli %arg0, %c1_i32 : i32
    %28 = arith.addi %27, %arg1 : i32
    %c8_i32 = arith.constant 8 : i32
    %29 = arith.muli %28, %c8_i32 : i32
    %30 = tpu.iota {dimensions = array<i32: 0>} : vector<8x1xi32>
    %31 = vector.broadcast %29 : i32 to vector<8x1xi32>
    %32 = arith.addi %30, %31 : vector<8x1xi32>
    %c8_i32_10 = arith.constant 8 : i32
    %33 = vector.broadcast %c8_i32_10 : i32 to vector<8x1xi32>
    %34 = arith.cmpi slt, %32, %33 : vector<8x1xi32>
    %cst_11 = arith.constant 0.000000e+00 : f32
    %35 = vector.broadcast %cst_11 : f32 to vector<8x1xf32>
    %36 = arith.select %34, %26, %35 : vector<8x1xi1>, vector<8x1xf32>
    %c0_12 = arith.constant 0 : index
    %c0_13 = arith.constant 0 : index
    %c0_14 = arith.constant 0 : index
    %37 = vector.load %arg4[%c0_12, %c0_13, %c0_14] : memref<1x1x128xf32, #tpu.memory_space<vmem>>, vector<1x1x128xf32>
    %38 = vector.shape_cast %36 : vector<8x1xf32> to vector<1x8x1xf32>
    %cst_15 = arith.constant dense<0.000000e+00> : vector<1xf32>
    %39 = vector.multi_reduction <add>, %38, %cst_15 [1, 2] : vector<1x8x1xf32> to vector<1xf32>
    %40 = vector.shape_cast %39 : vector<1xf32> to vector<1x1x1xf32>
    %41 = vector.extract %40[0, 0, 0] : f32 from vector<1x1x1xf32>
    %42 = vector.broadcast %41 : f32 to vector<1x1x128xf32>
    %43 = arith.addf %37, %42 : vector<1x1x128xf32>
    %c0_16 = arith.constant 0 : index
    %c0_17 = arith.constant 0 : index
    %c0_18 = arith.constant 0 : index
    %44 = vector.load %arg4[%c0_16, %c0_17, %c0_18] : memref<1x1x128xf32, #tpu.memory_space<vmem>>, vector<1x1x128xf32>
    tpu.vector_store %arg4[%c0_16, %c0_17, %c0_18], %43 {strides = array<i32>} : memref<1x1x128xf32, #tpu.memory_space<vmem>>, vector<1x1x128xf32>,
    return
  }
  func.func @transform_0(%arg0: i32, %arg1: i32) -> (i32, i32) {
    %c1_i32 = arith.constant 1 : i32
    %0 = arith.muli %arg0, %c1_i32 : i32
    %1 = arith.addi %0, %arg1 : i32
    %c0_i32 = arith.constant 0 : i32
    %2 = arith.minsi %1, %c0_i32 : i32
    %c0_i32_0 = arith.constant 0 : i32
    %c0_i32_1 = arith.constant 0 : i32
    return %2, %c0_i32_0 : i32, i32
  }
  func.func @transform_1(%arg0: i32, %arg1: i32) -> (i32, i32) {
    %c1_i32 = arith.constant 1 : i32
    %0 = arith.muli %arg0, %c1_i32 : i32
    %1 = arith.addi %0, %arg1 : i32
    %c0_i32 = arith.constant 0 : i32
    %2 = arith.minsi %1, %c0_i32 : i32
    %c0_i32_0 = arith.constant 0 : i32
    %c0_i32_1 = arith.constant 0 : i32
    return %2, %c0_i32_0 : i32, i32
  }
  func.func @transform_2(%arg0: i32, %arg1: i32) -> (i32, i32, i32) {
    %c0_i32 = arith.constant 0 : i32
    %c0_i32_0 = arith.constant 0 : i32
    %c0_i32_1 = arith.constant 0 : i32
    return %arg0, %c0_i32, %c0_i32_0 : i32, i32, i32
  }
}

</mosaic_0001>

<llo_original>
// kernel: tpu_custom_call.1
$region0: #{tpu_custom_call.1}
  #allocation0 [shape = 'u32[]', space=smem, size = 0x4, offset = 0x4, fixed_abs, tag = 'smem constant byte address 0x4 - core index']
  #allocation1 [shape = 'u32[144,128]{1,0:T(1,128)}', space=vmem, size = 0x12000, scoped, tag = 'internal scratch']
  %s0 = inlined_call_operand.vmem [shape: f32[8,32], index: 0, kind: input, shape index: {}]
  %s1 = inlined_call_operand.vmem [shape: s32[8,1], index: 1, kind: input, shape index: {}]
  %s2 = inlined_call_operand.hbm [shape: f32[1,1,128], index: 2, kind: output, shape index: {}]
  %s3 = sld [smem:[#allocation0]]
  $region22: #{tpu_custom_call.1} parent=0
    _
  %s5 = ssub.s32 1, %s3
  %s6 = scalar_select 0, %s5, %s3
  $region1: #{tpu_custom_call.1} parent=0
    #allocation2 [shape = 'u8[512]{0}', space=vmem, size = 0x400, scoped, tag = 'output window, operand 0, single buffered']
    #allocation3 [shape = 's32[1]{0}', space=sflag, size = 0x4, scoped, tag = 'scoped memory for tpu_custom_call.1']
    %7 = vsyncpa [#allocation3], 0
    // Predicated region
    $region2: #{tpu_custom_call.1} parent=1 // pred_check
      _
    $region3: #{tpu_custom_call.1} parent=1 // pred_check_branch
      %9 = sbr.rel (0) target = $region5
    $region4: #{tpu_custom_call.1} parent=1 // pred_region
      %s10 = sadd.s32 0, 0
      %p11 = scmp.lt.s32.totalorder %s10, 0
      %s12 = scalar_select %p11, %s10, 0
      %p13 = scmp.lt.s32.totalorder %s12, 0
      %s14 = scalar_select %p13, %s12, 0
      %s15 = smul.addr %s14, 8
      %s16 = scalar_lea.vmem %s0, %s15
      %s17 = sadd.s32 0, 0
      %p18 = scmp.lt.s32.totalorder %s17, 0
      %s19 = scalar_select %p18, %s17, 0
    $region5: #{tpu_custom_call.1} parent=1 // pred_fallthru
      _
    // Predicated region
    $region6: #{tpu_custom_call.1} parent=1 // pred_check
      _
    $region7: #{tpu_custom_call.1} parent=1 // pred_check_branch
      %21 = sbr.rel (0) target = $region9
    $region8: #{tpu_custom_call.1} parent=1 // pred_region
      %s22 = sadd.s32 0, 0
      %p23 = scmp.lt.s32.totalorder %s22, 0
      %s24 = scalar_select %p23, %s22, 0
      %p25 = scmp.lt.s32.totalorder %s24, 0
      %s26 = scalar_select %p25, %s24, 0
      %s27 = smul.addr %s26, 8
      %s28 = scalar_lea.vmem %s1, %s27
      %s29 = sadd.s32 0, 0
      %p30 = scmp.lt.s32.totalorder %s29, 0
      %s31 = scalar_select %p30, %s29, 0
    $region9: #{tpu_custom_call.1} parent=1 // pred_fallthru
      _
    %s32 = sadd.s32 0, 0
    %p33 = scmp.lt.s32.totalorder %s32, 0
    %s34 = scalar_select %p33, %s32, 0
    %p35 = scmp.lt.s32.totalorder %s34, 0
    %s36 = scalar_select %p35, %s34, 0
    %s37 = smul.addr %s36, 8
    %s38 = scalar_lea.vmem %s0, %s37
    %s39 = sadd.s32 0, 0
    %p40 = scmp.lt.s32.totalorder %s39, 0
    %s41 = scalar_select %p40, %s39, 0
    %p42 = scmp.lt.s32.totalorder %s41, 0
    %s43 = scalar_select %p42, %s41, 0
    %s44 = smul.addr %s43, 8
    %s45 = scalar_lea.vmem %s1, %s44
    %s46 = sadd.s32 0, 0
    %p47 = scmp.lt.s32.totalorder %s46, 0
    %s48 = scalar_select %p47, %s46, 0
    %p49 = scmp.lt.s32.totalorder %s48, 0
    %s50 = scalar_select %p49, %s48, 0
    %s51 = smul.addr %s50, 8
    %s52 = scalar_lea.vmem %s0, %s51
    %s53 = sadd.s32 0, 0
    %p54 = scmp.lt.s32.totalorder %s53, 0
    %s55 = scalar_select %p54, %s53, 0
    %s56 = sadd.s32 0, 0
    %p57 = scmp.lt.s32.totalorder %s56, 0
    %s58 = scalar_select %p57, %s56, 0
    %p59 = scmp.lt.s32.totalorder %s58, 0
    %s60 = scalar_select %p59, %s58, 0
    %s61 = smul.addr %s60, 8
    %s62 = scalar_lea.vmem %s1, %s61
    %s63 = sadd.s32 0, 0
    %p64 = scmp.lt.s32.totalorder %s63, 0
    %s65 = scalar_select %p64, %s63, 0
    %p66 = scmp.eq.s32.totalorder 0, 0
    // Predicated region
    $region10: #{tpu_custom_call.1} parent=1 // pred_check
      %p67 = pneg %p66
    $region11: #{tpu_custom_call.1} parent=1 // pred_check_branch
      %69 = sbr.rel (%p67) target = $region13
    $region12: #{tpu_custom_call.1} parent=1 // pred_region
      %70 = vst [vmem:[#allocation2] sm:$0x1] 0.0
    $region13: #{tpu_custom_call.1} parent=1 // pred_fallthru
      _
    %v71 = vld [vmem:[%s52] sm:$0xff]
    %v72 = vld [vmem:[%s62] sm:$0xff]
    %vm73 = vcmask 261120
    %v74 = vsel %vm73, %v71, -inf
    %75 = vmax.xlane.f32.xlu0 %v74
    %v76 = vpop.xlane.xlu0 %75
    %v77 = vsub.f32 %v71, %v76
    %v78 = vmul.f32 %v77, 1.442695
    %v79 = vpow.pop %v78
    %v80 = vsel %vm73, %v79, 0.0
    %81 = vadd.xlane.f32.xlu0 %v80
    %v82 = vpop.xlane.xlu0 %81
    %v83 = vlaneseq
    %v84 = vand.u32 %v83, 127
    %85 = vset.pattern.permute.xlu0 0
    %86 = vperm.xlu0 %85, %v72
    %v87 = vpop.permute.xlu0 %86
    %vm88 = vcmp.eq.s32.totalorder %v84, %v87
    %v89 = vsel %vm88, %v79, 0.0
    %v90 = vsel %vm73, %v89, 0.0
    %91 = vadd.xlane.f32.xlu0 %v90
    %v92 = vpop.xlane.xlu0 %91
    %v93 = vadd.f32 %v82, 1e-06
    %v94 = vrcp.pop %v93
    %v95 = vmul.f32 %v92, %v94
    %v96 = vadd.f32 %v95, 1e-06
    %v97 = vlog2.pop %v96
    %v98 = vmul.f32 %v97, 0.6931472
    %v99 = vsub.f32 0.0, %v98
    %s100 = sadd.s32 0, 0
    %s101 = smul.u32 %s100, 8
    %v102 = vlaneseq
    %v103 = vshrl.u32 %v102, 7
    %v104 = vstv %s101
    %v105 = vadd.s32 %v103, %v104
    %vm106 = vcmp.lt.s32.totalorder %v105, 8
    %v107 = vsel %vm106, %v99, 0.0
    %v108 = vld [vmem:[#allocation2] sm:$0x1]
    %vm109 = vcmask 7168
    %v110 = vsel %vm109, %v107, 0.0
    %111 = vadd.xlane.f32.xlu0 %v110
    %v112 = vpop.xlane.xlu0 %111
    %v113 = vrot.slane %v112, 4
    %v114 = vadd.f32 %v112, %v113
    %v115 = vrot.slane %v114, 2
    %v116 = vadd.f32 %v114, %v115
    %v117 = vrot.slane %v116, 1
    %v118 = vadd.f32 %v116, %v117
    %s119 = vtos %v118
    %v120 = vstv %s119
    %v121 = vadd.f32 %v108, %v120
    %122 = vst [vmem:[#allocation2] sm:$0x1] %v121
    // Predicated region
    $region14: #{tpu_custom_call.1} parent=1 // pred_check
      _
    $region15: #{tpu_custom_call.1} parent=1 // pred_check_branch
      %124 = sbr.rel (0) target = $region17
    $region16: #{tpu_custom_call.1} parent=1 // pred_region
      %s126 = ssub.s32 16, 16
      %127 = vsyncadd [#allocation3], %s126
      %s129 = sshll.u32 [#allocation2], 4
      %s130 = int_to_ptr.vmem [resolvable:$true] %s129
      %132 = dma.vmem_to_hbm [thread:$0]  %s130, 16, %s2, [#allocation3]
    $region17: #{tpu_custom_call.1} parent=1 // pred_fallthru
      _
    // Predicated region
    $region18: #{tpu_custom_call.1} parent=1 // pred_check
      _
    $region19: #{tpu_custom_call.1} parent=1 // pred_check_branch
      %134 = sbr.rel (0) target = $region21
    $region20: #{tpu_custom_call.1} parent=1 // pred_region
      %135 = dma.done [#allocation3], 16
    $region21: #{tpu_custom_call.1} parent=1 // pred_fallthru
      _
    %136 = vsyncpa [#allocation3], 1

</llo_original>
